<compile_context>
chip_gen: v7x
topology: tpu7x:2x2x1
jax: 0.10.0
libtpu: 0.0.40
codegen_flags: <defaults>
</compile_context>

<pallas_src>
import functools

import jax
import jax.numpy as jnp
from jax.experimental import pallas as pl
from jax.experimental.pallas import tpu as pltpu


def _kl_partial_kernel(logits_ref, targets_ref, part_ref, *,
                       rows, row_tile, lane_groups):
    """Per-tile partial KL sums.

    logits_ref / targets_ref : (row_tile, V) input blocks.
    part_ref                 : (8, out_width) per-tile output block — partial
                               sums folded over rows (and, when V % 128 == 0,
                               over 128-wide lane groups).
    """
    x = logits_ref[...].astype(jnp.float32)
    # Numerically stable log_softmax along the lane (vocab) axis.
    m = jnp.max(x, axis=-1, keepdims=True)
    lse = jnp.log(jnp.sum(jnp.exp(x - m), axis=-1, keepdims=True)) + m
    log_probs = x - lse

    t = targets_ref[...].astype(jnp.float32)
    safe_t = jnp.where(t > 0, t, 1.0)                 # log(1) = 0
    pointwise = t * (jnp.log(safe_t) - log_probs)     # exactly 0 where t == 0

    rt, v = pointwise.shape

    # Mask the ragged last tile (rows past the true row count read unspecified
    # data; jnp.where selects 0.0 there, so NaN/Inf cannot leak through).
    if rows % row_tile != 0:
        row_start = pl.program_id(0) * row_tile
        row_ids = row_start + jax.lax.broadcasted_iota(jnp.int32, (rt, 1), 0)
        pointwise = jnp.where(row_ids < rows, pointwise, 0.0)

    # Accumulate 128-wide lane groups with whole-vreg column slices so the
    # partial writeback is only 128 lanes wide (pure VPU adds, DMA-hidden).
    if lane_groups > 1:
        acc = pointwise[:, 0:128]
        for k in range(1, lane_groups):
            acc = acc + pointwise[:, k * 128:(k + 1) * 128]
    else:
        acc = pointwise

    # Fold rows into a sublane-aligned (8, out_width) partial block.
    part_ref[...] = jnp.sum(acc.reshape(rt // 8, 8, acc.shape[-1]), axis=0)


def _vmem_config():
    """Per-generation VMEM sizing: (input byte budget, scoped vmem limit)."""
    cap = 0
    try:
        info = pltpu.get_tpu_info()
        for name in ("vmem_capacity_bytes", "vmem_size_bytes", "vmem_bytes"):
            val = getattr(info, name, None)
            if isinstance(val, int) and val > 0:
                cap = val
                break
    except Exception:
        cap = 0
    if cap <= 0:
        cap = 64 << 20                       # conservative default (v7x per-TC)
    if cap >= (96 << 20):                    # v5e / v6e: 128 MiB physical VMEM
        return 24 << 20, 64 << 20
    return 12 << 20, 48 << 20                # v7x: 64 MiB per TensorCore


def consist_loss(logits, targets):
    """KLDivLoss(log_softmax(logits, -1), targets, reduction='batchmean')."""
    assert logits.shape == targets.shape
    batch = logits.shape[0]          # batchmean divides by input.size(0) only
    vocab = logits.shape[-1]
    rows = 1
    for d in logits.shape[:-1]:
        rows *= d

    logits2d = logits.reshape(rows, vocab)
    targets2d = targets.reshape(rows, vocab)

    input_budget, vmem_limit = _vmem_config()

    # --- budget-derived row tile -------------------------------------------
    it_l = jnp.dtype(logits.dtype).itemsize
    it_t = jnp.dtype(targets.dtype).itemsize
    sub = 16 if min(it_l, it_t) < 4 else 8            # bf16 needs (16,128) tiles
    # Double-buffered inputs + ~3 live f32 temporaries (x, log_probs, pointwise).
    bytes_per_row = 2 * vocab * (it_l + it_t) + 3 * vocab * 4
    row_tile = max(sub, input_budget // max(bytes_per_row, 1))
    row_tile = min(row_tile, pl.cdiv(rows, sub) * sub)  # no fixed cap
    row_tile = max((row_tile // sub) * sub, sub)

    num_tiles = pl.cdiv(rows, row_tile)

    lane_accumulate = (vocab % 128 == 0) and (vocab >= 128)
    lane_groups = vocab // 128 if lane_accumulate else 1
    out_width = 128 if lane_accumulate else vocab

    kernel = functools.partial(
        _kl_partial_kernel, rows=rows, row_tile=row_tile, lane_groups=lane_groups)

    partials = pl.pallas_call(
        kernel,
        out_shape=jax.ShapeDtypeStruct((num_tiles * 8, out_width), jnp.float32),
        grid_spec=pltpu.PrefetchScalarGridSpec(
            num_scalar_prefetch=0,
            grid=(num_tiles,),
            in_specs=[
                pl.BlockSpec((row_tile, vocab), lambda i: (i, 0)),
                pl.BlockSpec((row_tile, vocab), lambda i: (i, 0)),
            ],
            out_specs=pl.BlockSpec((8, out_width), lambda i: (i, 0)),
        ),
        compiler_params=pltpu.CompilerParams(
            dimension_semantics=("parallel",),
            vmem_limit_bytes=vmem_limit,
        ),
    )(logits2d, targets2d)

    # Final (tiny) reduction + batchmean normalization in plain XLA.
    return (jnp.sum(partials) / batch).astype(jnp.float32)


def _reference(logits, targets):
    logp = jax.nn.log_softmax(logits.astype(jnp.float32), axis=-1)
    t = targets.astype(jnp.float32)
    pw = jnp.where(t > 0, t * (jnp.log(jnp.where(t > 0, t, 1.0)) - logp), 0.0)
    return jnp.sum(pw) / logits.shape[0]


if __name__ == "__main__":
    key = jax.random.PRNGKey(0)
    k1, k2, k3, k4 = jax.random.split(key, 4)

    # Test 1: small vocab (< 128) -> (8, V) partial path, no ragged masking.
    B, S, V = 2, 8, 32
    logits = jax.random.normal(k1, (B, S, V), dtype=jnp.float32)
    targets = jax.nn.softmax(
        jax.random.normal(k2, (B, S, V), dtype=jnp.float32), axis=-1)
    loss = consist_loss(logits, targets)
    jax.block_until_ready(loss)
    ref = _reference(logits, targets)
    assert jnp.allclose(loss, ref, rtol=1e-5, atol=1e-5), (loss, ref)

    # Test 2: vocab multiple of 128 + ragged row count -> lane-group
    # accumulation path and in-kernel row mask.
    B2, S2, V2 = 2, 5, 256
    logits2 = jax.random.normal(k3, (B2, S2, V2), dtype=jnp.float32)
    targets2 = jax.nn.softmax(
        jax.random.normal(k4, (B2, S2, V2), dtype=jnp.float32), axis=-1)
    loss2 = consist_loss(logits2, targets2)
    jax.block_until_ready(loss2)
    ref2 = _reference(logits2, targets2)
    assert jnp.allclose(loss2, ref2, rtol=1e-5, atol=1e-5), (loss2, ref2)

    print("KERNEL_OK")
</pallas_src>

<mosaic_0001>
module attributes {stable_mosaic.version = 11 : i64} {
  func.func @_kl_partial_kernel(%arg0: i32, %arg1: memref<16x32xf32, #tpu.memory_space<vmem>>, %arg2: memref<16x32xf32, #tpu.memory_space<vmem>>, %arg3: memref<8x32xf32, #tpu.memory_space<vmem>>) attributes {dimension_semantics = [#tpu.dimension_semantics<parallel>], iteration_bounds = array<i64: 1>, scalar_prefetch = 0 : i64, scratch_operands = 0 : i64, tpu.core_type = #tpu.core_type<tc>, window_params = [{transform_indices = @transform_0, window_bounds = array<i64: 16, 32>}, {transform_indices = @transform_1, window_bounds = array<i64: 16, 32>}, {transform_indices = @transform_2, window_bounds = array<i64: 8, 32>}]} {
    %c0 = arith.constant 0 : index
    %c0_0 = arith.constant 0 : index
    %0 = vector.load %arg1[%c0, %c0_0] : memref<16x32xf32, #tpu.memory_space<vmem>>, vector<16x32xf32>
    %cst = arith.constant dense<0xFF800000> : vector<16xf32>
    %1 = vector.multi_reduction <maximumf>, %0, %cst [1] : vector<16x32xf32> to vector<16xf32>
    %2 = vector.shape_cast %1 : vector<16xf32> to vector<16x1xf32>
    %3 = vector.broadcast %2 : vector<16x1xf32> to vector<16x32xf32>
    %4 = arith.subf %0, %3 : vector<16x32xf32>
    %5 = math.exp %4 : vector<16x32xf32>
    %cst_1 = arith.constant dense<0.000000e+00> : vector<16xf32>
    %6 = vector.multi_reduction <add>, %5, %cst_1 [1] : vector<16x32xf32> to vector<16xf32>
    %7 = vector.shape_cast %6 : vector<16xf32> to vector<16x1xf32>
    %8 = math.log %7 : vector<16x1xf32>
    %9 = arith.addf %8, %2 : vector<16x1xf32>
    %10 = vector.broadcast %9 : vector<16x1xf32> to vector<16x32xf32>
    %11 = arith.subf %0, %10 : vector<16x32xf32>
    %c0_2 = arith.constant 0 : index
    %c0_3 = arith.constant 0 : index
    %12 = vector.load %arg2[%c0_2, %c0_3] : memref<16x32xf32, #tpu.memory_space<vmem>>, vector<16x32xf32>
    %cst_4 = arith.constant 0.000000e+00 : f32
    %13 = vector.broadcast %cst_4 : f32 to vector<16x32xf32>
    %14 = arith.cmpf ogt, %12, %13 : vector<16x32xf32>
    %cst_5 = arith.constant 1.000000e+00 : f32
    %15 = vector.broadcast %cst_5 : f32 to vector<16x32xf32>
    %16 = arith.select %14, %12, %15 : vector<16x32xi1>, vector<16x32xf32>
    %17 = math.log %16 : vector<16x32xf32>
    %18 = arith.subf %17, %11 : vector<16x32xf32>
    %19 = arith.mulf %12, %18 : vector<16x32xf32>
    %20 = vector.shape_cast %19 : vector<16x32xf32> to vector<2x8x32xf32>
    %cst_6 = arith.constant dense<0.000000e+00> : vector<8x32xf32>
    %21 = vector.multi_reduction <add>, %20, %cst_6 [0] : vector<2x8x32xf32> to vector<8x32xf32>
    %c0_7 = arith.constant 0 : index
    %c0_8 = arith.constant 0 : index
    %22 = vector.load %arg3[%c0_7, %c0_8] : memref<8x32xf32, #tpu.memory_space<vmem>>, vector<8x32xf32>
    tpu.vector_store %arg3[%c0_7, %c0_8], %21 {strides = array<i32>} : memref<8x32xf32, #tpu.memory_space<vmem>>, vector<8x32xf32>,
    return
  }
  func.func @transform_0(%arg0: i32) -> (i32, i32) {
    %c0_i32 = arith.constant 0 : i32
    %c0_i32_0 = arith.constant 0 : i32
    return %arg0, %c0_i32 : i32, i32
  }
  func.func @transform_1(%arg0: i32) -> (i32, i32) {
    %c0_i32 = arith.constant 0 : i32
    %c0_i32_0 = arith.constant 0 : i32
    return %arg0, %c0_i32 : i32, i32
  }
  func.func @transform_2(%arg0: i32) -> (i32, i32) {
    %c0_i32 = arith.constant 0 : i32
    %c0_i32_0 = arith.constant 0 : i32
    return %arg0, %c0_i32 : i32, i32
  }
}

</mosaic_0001>

<llo_original>
// kernel: tpu_custom_call.1
$region0: #{tpu_custom_call.1}
  #allocation0 [shape = 'u32[]', space=smem, size = 0x4, offset = 0x4, fixed_abs, tag = 'smem constant byte address 0x4 - core index']
  #allocation1 [shape = 'u32[144,128]{1,0:T(1,128)}', space=vmem, size = 0x12000, scoped, tag = 'internal scratch']
  %s0 = inlined_call_operand.hbm [shape: f32[16,32], index: 0, kind: input, shape index: {}]
  %s1 = inlined_call_operand.hbm [shape: f32[16,32], index: 1, kind: input, shape index: {}]
  %s2 = inlined_call_operand.hbm [shape: f32[8,32], index: 2, kind: output, shape index: {}]
  %s3 = sld [smem:[#allocation0]]
  $region26: #{tpu_custom_call.1} parent=0
    _
  %s5 = ssub.s32 1, %s3
  %s6 = scalar_select 0, %s5, %s3
  $region1: #{tpu_custom_call.1} parent=0
    #allocation2 [shape = 'u8[8192]{0}', space=vmem, size = 0x2000, scoped, tag = 'input window, operand 0, single buffered']
    #allocation3 [shape = 's32[1]{0}', space=sflag, size = 0x4, scoped, tag = 'scoped memory for tpu_custom_call.1']
    #allocation4 [shape = 's32[1]{0}', space=sflag, size = 0x4, scoped, tag = 'scoped memory for tpu_custom_call.1']
    #allocation5 [shape = 'u8[8192]{0}', space=vmem, size = 0x2000, scoped, tag = 'input window, operand 1, single buffered']
    #allocation6 [shape = 's32[1]{0}', space=sflag, size = 0x4, scoped, tag = 'scoped memory for tpu_custom_call.1']
    #allocation7 [shape = 'u8[4096]{0}', space=vmem, size = 0x1000, scoped, tag = 'output window, operand 0, single buffered']
    %7 = vsyncpa [#allocation3], 0
    %8 = vsyncpa [#allocation6], 0
    %9 = vsyncpa [#allocation4], 0
    // Predicated region
    $region2: #{tpu_custom_call.1} parent=1 // pred_check
      _
    $region3: #{tpu_custom_call.1} parent=1 // pred_check_branch
      %11 = sbr.rel (0) target = $region5
    $region4: #{tpu_custom_call.1} parent=1 // pred_region
      %s13 = ssub.s32 256, 256
      %14 = vsyncadd [#allocation3], %s13
      %s15 = sshll.u32 [#allocation2], 4
      %s16 = int_to_ptr.vmem [resolvable:$true] %s15
      %21 = dma.hbm_to_vmem [thread:$0]  %s0, 256, %s16, [#allocation3], 128, 128, 8
    $region5: #{tpu_custom_call.1} parent=1 // pred_fallthru
      _
    // Predicated region
    $region6: #{tpu_custom_call.1} parent=1 // pred_check
      _
    $region7: #{tpu_custom_call.1} parent=1 // pred_check_branch
      %23 = sbr.rel (0) target = $region9
    $region8: #{tpu_custom_call.1} parent=1 // pred_region
      %s25 = ssub.s32 256, 256
      %26 = vsyncadd [#allocation6], %s25
      %s27 = sshll.u32 [#allocation5], 4
      %s28 = int_to_ptr.vmem [resolvable:$true] %s27
      %33 = dma.hbm_to_vmem [thread:$0]  %s1, 256, %s28, [#allocation6], 128, 128, 8
    $region9: #{tpu_custom_call.1} parent=1 // pred_fallthru
      _
    // Predicated region
    $region10: #{tpu_custom_call.1} parent=1 // pred_check
      _
    $region11: #{tpu_custom_call.1} parent=1 // pred_check_branch
      %35 = sbr.rel (0) target = $region13
    $region12: #{tpu_custom_call.1} parent=1 // pred_region
      %36 = dma.done [#allocation3], 256
    $region13: #{tpu_custom_call.1} parent=1 // pred_fallthru
      _
    // Predicated region
    $region14: #{tpu_custom_call.1} parent=1 // pred_check
      _
    $region15: #{tpu_custom_call.1} parent=1 // pred_check_branch
      %38 = sbr.rel (0) target = $region17
    $region16: #{tpu_custom_call.1} parent=1 // pred_region
      %39 = dma.done [#allocation6], 256
    $region17: #{tpu_custom_call.1} parent=1 // pred_fallthru
      _
    %v40 = vld [vmem:[#allocation2] sm:$0xff]
    %v41 = vld [vmem:[#allocation2 + $0x8] sm:$0xff]
    %vm42 = vcmask 261120
    %v43 = vsel %vm42, %v40, -inf
    %44 = vmax.xlane.f32.xlu0 %v43
    %v45 = vpop.xlane.xlu0 %44
    %v46 = vsel %vm42, %v41, -inf
    %47 = vmax.xlane.f32.xlu0 %v46
    %v48 = vpop.xlane.xlu0 %47
    %v49 = vsub.f32 %v40, %v45
    %v50 = vsub.f32 %v41, %v48
    %v51 = vmul.f32 %v49, 1.442695
    %v52 = vpow.pop %v51
    %v53 = vmul.f32 %v50, 1.442695
    %v54 = vpow.pop %v53
    %v55 = vsel %vm42, %v52, 0.0
    %56 = vadd.xlane.f32.xlu0 %v55
    %v57 = vpop.xlane.xlu0 %56
    %v58 = vsel %vm42, %v54, 0.0
    %59 = vadd.xlane.f32.xlu0 %v58
    %v60 = vpop.xlane.xlu0 %59
    %v61 = vlog2.pop %v57
    %v62 = vmul.f32 %v61, 0.6931472
    %v63 = vlog2.pop %v60
    %v64 = vmul.f32 %v63, 0.6931472
    %v65 = vadd.f32 %v62, %v45
    %v66 = vadd.f32 %v64, %v48
    %v67 = vsub.f32 %v40, %v65
    %v68 = vsub.f32 %v41, %v66
    %v69 = vld [vmem:[#allocation5] sm:$0xff]
    %v70 = vld [vmem:[#allocation5 + $0x8] sm:$0xff]
    %vm71 = vcmp.gt.f32.partialorder %v69, 0.0
    %vm72 = vcmp.gt.f32.partialorder %v70, 0.0
    %v73 = vsel %vm71, %v69, 1.0
    %v74 = vsel %vm72, %v70, 1.0
    %v75 = vlog2.pop %v73
    %v76 = vmul.f32 %v75, 0.6931472
    %v77 = vlog2.pop %v74
    %v78 = vmul.f32 %v77, 0.6931472
    %v79 = vsub.f32 %v76, %v67
    %v80 = vsub.f32 %v78, %v68
    %v81 = vmul.f32 %v69, %v79
    %v82 = vmul.f32 %v70, %v80
    %v83 = vsel %vm42, %v81, 0.0
    %v84 = vsel %vm42, %v82, 0.0
    %v85 = vadd.f32 %v83, %v84
    %86 = vst.msk [vmem:[#allocation7] sm:$0xff] %vm42, %v85
    // Predicated region
    $region18: #{tpu_custom_call.1} parent=1 // pred_check
      _
    $region19: #{tpu_custom_call.1} parent=1 // pred_check_branch
      %88 = sbr.rel (0) target = $region21
    $region20: #{tpu_custom_call.1} parent=1 // pred_region
      %s90 = ssub.s32 128, 128
      %91 = vsyncadd [#allocation4], %s90
      %s93 = sshll.u32 [#allocation7], 4
      %s94 = int_to_ptr.vmem [resolvable:$true] %s93
      %96 = dma.vmem_to_hbm [thread:$0]  %s94, 128, %s2, [#allocation4]
    $region21: #{tpu_custom_call.1} parent=1 // pred_fallthru
      _
    // Predicated region
    $region22: #{tpu_custom_call.1} parent=1 // pred_check
      _
    $region23: #{tpu_custom_call.1} parent=1 // pred_check_branch
      %98 = sbr.rel (0) target = $region25
    $region24: #{tpu_custom_call.1} parent=1 // pred_region
      %99 = dma.done [#allocation4], 128
    $region25: #{tpu_custom_call.1} parent=1 // pred_fallthru
      _
    %100 = vsyncpa [#allocation3], 1
    %101 = vsyncpa [#allocation6], 1
    %102 = vsyncpa [#allocation4], 1

</llo_original>
